<compile_context>
chip_gen: v7x
topology: tpu7x:2x2x1
jax: 0.10.0
libtpu: 0.0.40
codegen_flags: <defaults>
</compile_context>

<pallas_src>
import math

import numpy as np
import jax
import jax.numpy as jnp
from jax.experimental import pallas as pl
from jax.experimental.pallas import tpu as pltpu

# ---- module hyper-parameters (from FocalOC_loss.__init__) ----
ALPHA = 4
GAMM = 1.0
SCALE_POS = 40.0
SCALE_NEG = 40.0
R_REAL = 0.05
R_FAKE = 0.4
EPS = 1e-12          # F.normalize eps
_EXP_CLAMP = 80.0    # keeps exp() finite in f32 (never binds for |score|<=1)


def focaloc_kernel(x_ref, w_ref, mask_ref, scores_ref, partial_ref):
    """One batch tile.

    x_ref:       (TB, D)   features, native dtype (cast to f32 in VMEM)
    w_ref:       (1, D)    class center, native dtype
    mask_ref:    (TB, 4)   f32 columns [m1, (1-m1)*valid, m2, (1-m2)*valid]
    scores_ref:  (TB, 1)   f32 cosine-score output
    partial_ref: (1, 8, 4) f32 per-tile partial sums (all rows identical)
    """
    x = x_ref[...].astype(jnp.float32)           # in-VMEM upcast
    w = w_ref[...].astype(jnp.float32)

    # F.normalize(center): w / max(||w||, eps) == w * rsqrt(max(||w||^2, eps^2))
    w_n = w * jax.lax.rsqrt(
        jnp.maximum(jnp.sum(w * w, axis=1, keepdims=True), EPS * EPS))

    # Fused normalize(x) + dot with the single center:
    #   s = (x . w_n) / max(||x||, eps)
    sxw = jnp.sum(x * w_n, axis=1, keepdims=True)          # (TB, 1)
    sxx = jnp.sum(x * x, axis=1, keepdims=True)            # (TB, 1)
    s = sxw * jax.lax.rsqrt(jnp.maximum(sxx, EPS * EPS))    # (TB, 1)
    scores_ref[...] = s

    d = (1.0 - s) * 0.5                                     # distance

    sigma_true = jnp.maximum(d, 0.0) ** ALPHA
    sigma_fake = jnp.maximum(0.5 - d, 0.0) ** ALPHA
    e_true = sigma_true * jnp.exp(jnp.minimum(SCALE_POS * (d - R_REAL), _EXP_CLAMP))
    e_fake = sigma_fake * jnp.exp(jnp.minimum(SCALE_NEG * (R_FAKE - d), _EXP_CLAMP))

    # Single combined masked reduction.
    # Columns of `masks`: [true@m1, fake@~m1, true@m2, fake@~m2] (valid rows only)
    masks = mask_ref[...]                                   # (TB, 4)
    col = jax.lax.broadcasted_iota(jnp.int32, masks.shape, 1)
    e4 = jnp.where(col % 2 == 0, e_true, e_fake)            # (TB, 4)
    partial = jnp.sum(masks * e4, axis=0, keepdims=True)    # (1, 4)
    partial_ref[...] = jnp.broadcast_to(partial, partial_ref.shape)


def _round_up(n, m):
    return (n + m - 1) // m * m


def _call_kernel(x, centers, masks):
    """x: (B, D) native dtype, centers: (1, D), masks: (B, 4) f32."""
    B, D = x.shape
    itemsize = jnp.dtype(x.dtype).itemsize
    sublane = 16 if itemsize < 4 else 8          # bf16 packs 16 rows / vreg
    tb = min(512, _round_up(B, sublane))         # big tiles amortize per-step cost
    b_pad = _round_up(B, tb)
    if b_pad != B:
        # padded rows: zero features and zero masks -> contribute nothing
        x = jnp.pad(x, ((0, b_pad - B), (0, 0)))
        masks = jnp.pad(masks, ((0, b_pad - B), (0, 0)))
    nb = b_pad // tb

    cost = pl.CostEstimate(
        flops=6 * b_pad * D,
        transcendentals=3 * b_pad,
        bytes_accessed=int(b_pad * D * itemsize
                           + D * jnp.dtype(centers.dtype).itemsize
                           + b_pad * (4 * 4 + 4) + nb * 8 * 4 * 4),
    )
    # Sized for v7x's smaller (64 MiB physical / 32 MiB scoped) VMEM as well.
    vmem_bytes = int(min(max(8 * tb * D * 4, 16 * 1024 * 1024), 30 * 1024 * 1024))

    scores, partials = pl.pallas_call(
        focaloc_kernel,
        out_shape=(
            jax.ShapeDtypeStruct((b_pad, 1), jnp.float32),
            jax.ShapeDtypeStruct((nb, 8, 4), jnp.float32),
        ),
        grid=(nb,),
        in_specs=[
            pl.BlockSpec((tb, D), lambda i: (i, 0)),
            pl.BlockSpec((1, D), lambda i: (0, 0)),
            pl.BlockSpec((tb, 4), lambda i: (i, 0)),
        ],
        out_specs=(
            pl.BlockSpec((tb, 1), lambda i: (i, 0)),
            pl.BlockSpec((1, 8, 4), lambda i: (i, 0, 0)),
        ),
        compiler_params=pltpu.CompilerParams(
            dimension_semantics=("parallel",),   # v7x: shard grid over 2 TCs
            vmem_limit_bytes=vmem_bytes,
        ),
        cost_estimate=cost,
    )(x, centers, masks)

    sums = jnp.sum(partials[:, 0, :], axis=0)    # (4,) cross-block reduce
    return scores[:B, 0], sums


def focaloc_forward(x, labels, lam, index, centers):
    """Mirrors FocalOC_loss.forward(x, labels, lam, index)."""
    m1 = (labels == 1).astype(jnp.float32)                  # (B,)
    if index is not None:
        m2 = (labels[index] == 1).astype(jnp.float32)
        lam_f = jnp.asarray(lam, jnp.float32)
    else:
        m2 = m1
        lam_f = jnp.float32(1.0)
    masks = jnp.stack([m1, 1.0 - m1, m2, 1.0 - m2], axis=1)  # (B, 4)

    scores, sums = _call_kernel(x, centers, masks)

    true_1 = 0.5 * jnp.log(1.0 + sums[0])
    false_1 = 0.5 * jnp.log(1.0 + sums[1])
    true_2 = 0.5 * jnp.log(1.0 + sums[2])
    false_2 = 0.5 * jnp.log(1.0 + sums[3])
    loss_1 = true_1 + GAMM * false_1
    loss_2 = true_2 + GAMM * false_2

    loss = lam_f * loss_1 + (1.0 - lam_f) * loss_2
    true_loss = lam_f * true_1 + (1.0 - lam_f) * true_2
    false_loss = lam_f * false_1 + (1.0 - lam_f) * false_2
    return loss, true_loss, false_loss, scores


def focaloc_reference(x, labels, lam, index, centers):
    """Pure-JAX reference mirroring the PyTorch module (for correctness check)."""
    x = x.astype(jnp.float32)
    centers = centers.astype(jnp.float32)
    w = centers / jnp.maximum(jnp.linalg.norm(centers, axis=1, keepdims=True), EPS)
    xn = x / jnp.maximum(jnp.linalg.norm(x, axis=1, keepdims=True), EPS)
    s = xn @ w.T
    d = (1.0 - s) / 2.0

    def calc(dist, mask):
        mask = mask.reshape(-1, 1)
        e_t = jnp.maximum(dist, 0.0) ** ALPHA * jnp.exp(SCALE_POS * (dist - R_REAL))
        e_f = jnp.maximum(0.5 - dist, 0.0) ** ALPHA * jnp.exp(SCALE_NEG * (R_FAKE - dist))
        t = 0.5 * jnp.log(1.0 + jnp.sum(e_t * mask))
        f = 0.5 * jnp.log(1.0 + jnp.sum(e_f * (1.0 - mask)))
        return t + GAMM * f, t, f

    m1 = (labels == 1).astype(jnp.float32)
    if index is not None:
        m2 = (labels[index] == 1).astype(jnp.float32)
        lam = jnp.float32(lam)
        l1, t1, f1 = calc(d, m1)
        l2, t2, f2 = calc(d, m2)
        return (lam * l1 + (1 - lam) * l2, lam * t1 + (1 - lam) * t2,
                lam * f1 + (1 - lam) * f2, s[:, 0])
    l, t, f = calc(d, m1)
    return l, t, f, s[:, 0]


def init_centers(key, feat_dim):
    # nn.init.kaiming_uniform_(centers, a=0.25) on a (1, feat_dim) parameter.
    a = 0.25
    gain = math.sqrt(2.0 / (1.0 + a * a))
    bound = gain * math.sqrt(3.0 / feat_dim)
    return jax.random.uniform(key, (1, feat_dim), dtype=jnp.float32,
                              minval=-bound, maxval=bound)


if __name__ == "__main__":
    B, FEAT_DIM = 16, 212          # module default feat_dim=212
    key = jax.random.PRNGKey(0)
    k_c, k_x, k_l, k_i = jax.random.split(key, 4)

    centers = init_centers(k_c, FEAT_DIM)                          # (1, D)
    x = jax.random.normal(k_x, (B, FEAT_DIM), dtype=jnp.float32)   # (B, D)
    labels = jax.random.bernoulli(k_l, 0.5, (B,)).astype(jnp.int32)
    index = jax.random.permutation(k_i, B)                         # mixup perm
    lam = 0.7

    out = focaloc_forward(x, labels, lam, index, centers)
    jax.block_until_ready(out)

    # correctness check vs. pure-JAX reference
    ref = focaloc_reference(x, labels, lam, index, centers)
    for a, b in zip(out, ref):
        np.testing.assert_allclose(np.asarray(a), np.asarray(b),
                                   rtol=2e-3, atol=2e-3)

    # index=None branch
    out_none = focaloc_forward(x, labels, lam, None, centers)
    jax.block_until_ready(out_none)

    # native bf16 path (no wrapper upcast; cast happens inside VMEM)
    out_bf16 = focaloc_forward(x.astype(jnp.bfloat16), labels, lam, index,
                               centers.astype(jnp.bfloat16))
    jax.block_until_ready(out_bf16)

    print("KERNEL_OK")
</pallas_src>

<mosaic_0001>
module attributes {stable_mosaic.version = 11 : i64} {
  func.func @focaloc_kernel(%arg0: i32, %arg1: memref<16x212xf32, #tpu.memory_space<vmem>>, %arg2: memref<1x212xf32, #tpu.memory_space<vmem>>, %arg3: memref<16x4xf32, #tpu.memory_space<vmem>>, %arg4: memref<16x1xf32, #tpu.memory_space<vmem>>, %arg5: memref<1x8x4xf32, #tpu.memory_space<vmem>>) attributes {dimension_semantics = [#tpu.dimension_semantics<parallel>], iteration_bounds = array<i64: 1>, scalar_prefetch = 0 : i64, scratch_operands = 0 : i64, tpu.core_type = #tpu.core_type<tc>, window_params = [{transform_indices = @transform_0, window_bounds = array<i64: 16, 212>}, {pipeline_mode = #tpu.pipeline_mode<synchronous>, transform_indices = @transform_1, window_bounds = array<i64: 1, 212>}, {transform_indices = @transform_2, window_bounds = array<i64: 16, 4>}, {transform_indices = @transform_3, window_bounds = array<i64: 16, 1>}, {transform_indices = @transform_4, window_bounds = array<i64: 1, 8, 4>}]} {
    %c0 = arith.constant 0 : index
    %c0_0 = arith.constant 0 : index
    %0 = vector.load %arg1[%c0, %c0_0] : memref<16x212xf32, #tpu.memory_space<vmem>>, vector<16x212xf32>
    %c0_1 = arith.constant 0 : index
    %c0_2 = arith.constant 0 : index
    %1 = vector.load %arg2[%c0_1, %c0_2] : memref<1x212xf32, #tpu.memory_space<vmem>>, vector<1x212xf32>
    %2 = arith.mulf %1, %1 : vector<1x212xf32>
    %cst = arith.constant dense<0.000000e+00> : vector<1xf32>
    %3 = vector.multi_reduction <add>, %2, %cst [1] : vector<1x212xf32> to vector<1xf32>
    %4 = vector.shape_cast %3 : vector<1xf32> to vector<1x1xf32>
    %cst_3 = arith.constant 1.000000e-24 : f32
    %5 = vector.broadcast %cst_3 : f32 to vector<1x1xf32>
    %6 = arith.maximumf %4, %5 : vector<1x1xf32>
    %7 = math.rsqrt %6 : vector<1x1xf32>
    %8 = vector.broadcast %7 : vector<1x1xf32> to vector<1x212xf32>
    %9 = arith.mulf %1, %8 : vector<1x212xf32>
    %10 = vector.broadcast %9 : vector<1x212xf32> to vector<16x212xf32>
    %11 = arith.mulf %0, %10 : vector<16x212xf32>
    %cst_4 = arith.constant dense<0.000000e+00> : vector<16xf32>
    %12 = vector.multi_reduction <add>, %11, %cst_4 [1] : vector<16x212xf32> to vector<16xf32>
    %13 = vector.shape_cast %12 : vector<16xf32> to vector<16x1xf32>
    %14 = arith.mulf %0, %0 : vector<16x212xf32>
    %cst_5 = arith.constant dense<0.000000e+00> : vector<16xf32>
    %15 = vector.multi_reduction <add>, %14, %cst_5 [1] : vector<16x212xf32> to vector<16xf32>
    %16 = vector.shape_cast %15 : vector<16xf32> to vector<16x1xf32>
    %cst_6 = arith.constant 1.000000e-24 : f32
    %17 = vector.broadcast %cst_6 : f32 to vector<16x1xf32>
    %18 = arith.maximumf %16, %17 : vector<16x1xf32>
    %19 = math.rsqrt %18 : vector<16x1xf32>
    %20 = arith.mulf %13, %19 : vector<16x1xf32>
    %c0_7 = arith.constant 0 : index
    %c0_8 = arith.constant 0 : index
    %21 = vector.load %arg4[%c0_7, %c0_8] : memref<16x1xf32, #tpu.memory_space<vmem>>, vector<16x1xf32>
    tpu.vector_store %arg4[%c0_7, %c0_8], %20 {strides = array<i32>} : memref<16x1xf32, #tpu.memory_space<vmem>>, vector<16x1xf32>,
    %cst_9 = arith.constant 1.000000e+00 : f32
    %22 = vector.broadcast %cst_9 : f32 to vector<16x1xf32>
    %23 = arith.subf %22, %20 : vector<16x1xf32>
    %cst_10 = arith.constant 5.000000e-01 : f32
    %24 = vector.broadcast %cst_10 : f32 to vector<16x1xf32>
    %25 = arith.mulf %23, %24 : vector<16x1xf32>
    %cst_11 = arith.constant 0.000000e+00 : f32
    %26 = vector.broadcast %cst_11 : f32 to vector<16x1xf32>
    %27 = arith.maximumf %25, %26 : vector<16x1xf32>
    %28 = arith.mulf %27, %27 : vector<16x1xf32>
    %29 = arith.mulf %28, %28 : vector<16x1xf32>
    %cst_12 = arith.constant 5.000000e-01 : f32
    %30 = vector.broadcast %cst_12 : f32 to vector<16x1xf32>
    %31 = arith.subf %30, %25 : vector<16x1xf32>
    %cst_13 = arith.constant 0.000000e+00 : f32
    %32 = vector.broadcast %cst_13 : f32 to vector<16x1xf32>
    %33 = arith.maximumf %31, %32 : vector<16x1xf32>
    %34 = arith.mulf %33, %33 : vector<16x1xf32>
    %35 = arith.mulf %34, %34 : vector<16x1xf32>
    %cst_14 = arith.constant 5.000000e-02 : f32
    %36 = vector.broadcast %cst_14 : f32 to vector<16x1xf32>
    %37 = arith.subf %25, %36 : vector<16x1xf32>
    %cst_15 = arith.constant 4.000000e+01 : f32
    %38 = vector.broadcast %cst_15 : f32 to vector<16x1xf32>
    %39 = arith.mulf %38, %37 : vector<16x1xf32>
    %cst_16 = arith.constant 8.000000e+01 : f32
    %40 = vector.broadcast %cst_16 : f32 to vector<16x1xf32>
    %41 = arith.minimumf %39, %40 : vector<16x1xf32>
    %42 = math.exp %41 : vector<16x1xf32>
    %43 = arith.mulf %29, %42 : vector<16x1xf32>
    %cst_17 = arith.constant 4.000000e-01 : f32
    %44 = vector.broadcast %cst_17 : f32 to vector<16x1xf32>
    %45 = arith.subf %44, %25 : vector<16x1xf32>
    %cst_18 = arith.constant 4.000000e+01 : f32
    %46 = vector.broadcast %cst_18 : f32 to vector<16x1xf32>
    %47 = arith.mulf %46, %45 : vector<16x1xf32>
    %cst_19 = arith.constant 8.000000e+01 : f32
    %48 = vector.broadcast %cst_19 : f32 to vector<16x1xf32>
    %49 = arith.minimumf %47, %48 : vector<16x1xf32>
    %50 = math.exp %49 : vector<16x1xf32>
    %51 = arith.mulf %35, %50 : vector<16x1xf32>
    %c0_20 = arith.constant 0 : index
    %c0_21 = arith.constant 0 : index
    %52 = vector.load %arg3[%c0_20, %c0_21] : memref<16x4xf32, #tpu.memory_space<vmem>>, vector<16x4xf32>
    %53 = tpu.iota {dimensions = array<i32: 1>} : vector<16x4xi32>
    %c2_i32 = arith.constant 2 : i32
    %c0_i32 = arith.constant 0 : i32
    %54 = arith.cmpi eq, %c2_i32, %c0_i32 : i32
    %c1_i32 = arith.constant 1 : i32
    %55 = arith.select %54, %c1_i32, %c2_i32 : i32
    %56 = vector.broadcast %55 : i32 to vector<16x4xi32>
    %57 = arith.remsi %53, %56 : vector<16x4xi32>
    %c0_i32_22 = arith.constant 0 : i32
    %58 = vector.broadcast %c0_i32_22 : i32 to vector<16x4xi32>
    %59 = arith.cmpi ne, %57, %58 : vector<16x4xi32>
    %c0_i32_23 = arith.constant 0 : i32
    %60 = vector.broadcast %c0_i32_23 : i32 to vector<16x4xi32>
    %61 = arith.cmpi slt, %57, %60 : vector<16x4xi32>
    %c0_i32_24 = arith.constant 0 : i32
    %62 = arith.cmpi slt, %55, %c0_i32_24 : i32
    %63 = vector.broadcast %62 : i1 to vector<16x4xi1>
    %64 = vector.broadcast %63 : vector<16x4xi1> to vector<16x4xi1>
    %65 = arith.xori %61, %64 : vector<16x4xi1>
    %66 = arith.andi %65, %59 : vector<16x4xi1>
    %67 = vector.broadcast %55 : i32 to vector<16x4xi32>
    %68 = arith.addi %57, %67 : vector<16x4xi32>
    %69 = arith.select %66, %68, %57 : vector<16x4xi1>, vector<16x4xi32>
    %c0_i32_25 = arith.constant 0 : i32
    %70 = vector.broadcast %c0_i32_25 : i32 to vector<16x4xi32>
    %71 = arith.cmpi eq, %69, %70 : vector<16x4xi32>
    %72 = vector.shape_cast %43 : vector<16x1xf32> to vector<16x1xf32>
    %73 = vector.broadcast %72 : vector<16x1xf32> to vector<16x4xf32>
    %74 = vector.shape_cast %51 : vector<16x1xf32> to vector<16x1xf32>
    %75 = vector.broadcast %74 : vector<16x1xf32> to vector<16x4xf32>
    %76 = arith.select %71, %73, %75 : vector<16x4xi1>, vector<16x4xf32>
    %77 = arith.mulf %52, %76 : vector<16x4xf32>
    %cst_26 = arith.constant dense<0.000000e+00> : vector<4xf32>
    %78 = vector.multi_reduction <add>, %77, %cst_26 [0] : vector<16x4xf32> to vector<4xf32>
    %79 = vector.shape_cast %78 : vector<4xf32> to vector<1x4xf32>
    %80 = vector.shape_cast %79 : vector<1x4xf32> to vector<1x1x4xf32>
    %81 = vector.broadcast %80 : vector<1x1x4xf32> to vector<1x8x4xf32>
    %c0_27 = arith.constant 0 : index
    %c0_28 = arith.constant 0 : index
    %c0_29 = arith.constant 0 : index
    %82 = vector.load %arg5[%c0_27, %c0_28, %c0_29] : memref<1x8x4xf32, #tpu.memory_space<vmem>>, vector<1x8x4xf32>
    tpu.vector_store %arg5[%c0_27, %c0_28, %c0_29], %81 {strides = array<i32>} : memref<1x8x4xf32, #tpu.memory_space<vmem>>, vector<1x8x4xf32>,
    return
  }
  func.func @transform_0(%arg0: i32) -> (i32, i32) {
    %c0_i32 = arith.constant 0 : i32
    %c0_i32_0 = arith.constant 0 : i32
    return %arg0, %c0_i32 : i32, i32
  }
  func.func @transform_1(%arg0: i32) -> (i32, i32) {
    %c0_i32 = arith.constant 0 : i32
    %c0_i32_0 = arith.constant 0 : i32
    %c0_i32_1 = arith.constant 0 : i32
    return %c0_i32, %c0_i32_0 : i32, i32
  }
  func.func @transform_2(%arg0: i32) -> (i32, i32) {
    %c0_i32 = arith.constant 0 : i32
    %c0_i32_0 = arith.constant 0 : i32
    return %arg0, %c0_i32 : i32, i32
  }
  func.func @transform_3(%arg0: i32) -> (i32, i32) {
    %c0_i32 = arith.constant 0 : i32
    %c0_i32_0 = arith.constant 0 : i32
    return %arg0, %c0_i32 : i32, i32
  }
  func.func @transform_4(%arg0: i32) -> (i32, i32, i32) {
    %c0_i32 = arith.constant 0 : i32
    %c0_i32_0 = arith.constant 0 : i32
    %c0_i32_1 = arith.constant 0 : i32
    return %arg0, %c0_i32, %c0_i32_0 : i32, i32, i32
  }
}

</mosaic_0001>

<llo_original>
// kernel: tpu_custom_call.1
$region0: #{tpu_custom_call.1}
  #allocation0 [shape = 'u32[]', space=smem, size = 0x4, offset = 0x4, fixed_abs, tag = 'smem constant byte address 0x4 - core index']
  #allocation1 [shape = 'u32[144,128]{1,0:T(1,128)}', space=vmem, size = 0x12000, scoped, tag = 'internal scratch']
  %s0 = inlined_call_operand.hbm [shape: f32[16,212], index: 0, kind: input, shape index: {}]
  %s1 = inlined_call_operand.vmem [shape: f32[1,212], index: 1, kind: input, shape index: {}]
  %s2 = inlined_call_operand.vmem [shape: f32[16,4], index: 2, kind: input, shape index: {}]
  %s3 = inlined_call_operand.vmem [shape: f32[16,1], index: 3, kind: output, shape index: {0}]
  %s4 = inlined_call_operand.vmem [shape: f32[1,8,4], index: 4, kind: output, shape index: {1}]
  %5 = xla_tuple %s3, %s4
  %s6 = sld [smem:[#allocation0]]
  $region34: #{tpu_custom_call.1} parent=0
    _
  %s8 = ssub.s32 1, %s6
  %s9 = scalar_select 0, %s8, %s6
  $region1: #{tpu_custom_call.1} parent=0
    #allocation2 [shape = 'u8[16384]{0}', space=vmem, size = 0x4000, scoped, tag = 'input window, operand 0, single buffered']
    #allocation3 [shape = 's32[1]{0}', space=sflag, size = 0x4, scoped, tag = 'scoped memory for tpu_custom_call.1']
    %10 = vsyncpa [#allocation3], 0
    // Predicated region
    $region2: #{tpu_custom_call.1} parent=1 // pred_check
      _
    $region3: #{tpu_custom_call.1} parent=1 // pred_check_branch
      %12 = sbr.rel (0) target = $region5
    $region4: #{tpu_custom_call.1} parent=1 // pred_region
      %s14 = ssub.s32 512, 512
      %15 = vsyncadd [#allocation3], %s14
      %s16 = sshll.u32 [#allocation2], 4
      %s17 = int_to_ptr.vmem [resolvable:$true] %s16
      %22 = dma.hbm_to_vmem [thread:$0]  %s0, 512, %s17, [#allocation3], 256, 256, 16
    $region5: #{tpu_custom_call.1} parent=1 // pred_fallthru
      _
    // Predicated region
    $region6: #{tpu_custom_call.1} parent=1 // pred_check
      _
    $region7: #{tpu_custom_call.1} parent=1 // pred_check_branch
      %24 = sbr.rel (0) target = $region9
    $region8: #{tpu_custom_call.1} parent=1 // pred_region
      _
    $region9: #{tpu_custom_call.1} parent=1 // pred_fallthru
      _
    // Predicated region
    $region10: #{tpu_custom_call.1} parent=1 // pred_check
      _
    $region11: #{tpu_custom_call.1} parent=1 // pred_check_branch
      %26 = sbr.rel (0) target = $region13
    $region12: #{tpu_custom_call.1} parent=1 // pred_region
      _
    $region13: #{tpu_custom_call.1} parent=1 // pred_fallthru
      _
    // Predicated region
    $region14: #{tpu_custom_call.1} parent=1 // pred_check
      _
    $region15: #{tpu_custom_call.1} parent=1 // pred_check_branch
      %28 = sbr.rel (0) target = $region17
    $region16: #{tpu_custom_call.1} parent=1 // pred_region
      %29 = dma.done [#allocation3], 512
    $region17: #{tpu_custom_call.1} parent=1 // pred_fallthru
      _
    %v30 = vld [vmem:[#allocation2] sm:$0xff]
    %v31 = vld [vmem:[#allocation2 + $0x8] sm:$0xff]
    %v32 = vld [vmem:[#allocation2 + $0x10] sm:$0xff]
    %v33 = vld [vmem:[#allocation2 + $0x18] sm:$0xff]
    %v34 = vld [vmem:[%s1] sm:$0x3]
    %v35 = vmul.f32 %v34, %v34
    %v37 = vlaneseq
    %v38 = vshrl.u32 %v37, 7
    %v39 = vsub.s32 0, %v38
    %v40 = vrot.slane %v35, %v39
    %v41 = vlaneseq
    %v42 = vshrl.u32 %v41, 7
    %v43 = vsub.s32 1, %v42
    %v44 = vrot.slane %v35, %v43
    %vm47 = vcmask 1040384
    %v48 = vsel %vm47, %v40, 0.0
    %vm49 = vcmask 679936
    %v50 = vsel %vm49, %v44, 0.0
    %v51 = vadd.f32 %v48, %v50
    %52 = vadd.xlane.f32.xlu0 %v51
    %v53 = vpop.xlane.xlu0 %52
    %v54 = vmax.f32 %v53, 1e-24
    %v55 = vrsqrt.pop %v54
    %v57 = vlaneseq
    %v58 = vshrl.u32 %v57, 7
    %v59 = vsub.s32 0, %v58
    %v60 = vrot.slane %v55, %v59
    %v62 = vmul.f32 %v34, %v60
    %v64 = vlaneseq
    %v65 = vshrl.u32 %v64, 7
    %v66 = vsub.s32 0, %v65
    %v67 = vrot.slane %v62, %v66
    %v68 = vlaneseq
    %v69 = vshrl.u32 %v68, 7
    %v70 = vsub.s32 1, %v69
    %v71 = vrot.slane %v62, %v70
    %v74 = vmul.f32 %v30, %v67
    %v75 = vmul.f32 %v31, %v71
    %v76 = vmul.f32 %v32, %v67
    %v77 = vmul.f32 %v33, %v71
    %vm78 = vcmask 687104
    %v79 = vsel %vm78, %v75, 0.0
    %v80 = vadd.f32 %v74, %v79
    %81 = vadd.xlane.f32.xlu0 %v80
    %v82 = vpop.xlane.xlu0 %81
    %v83 = vsel %vm78, %v77, 0.0
    %v84 = vadd.f32 %v76, %v83
    %85 = vadd.xlane.f32.xlu0 %v84
    %v86 = vpop.xlane.xlu0 %85
    %v87 = vmul.f32 %v30, %v30
    %v88 = vmul.f32 %v31, %v31
    %v89 = vmul.f32 %v32, %v32
    %v90 = vmul.f32 %v33, %v33
    %v91 = vsel %vm78, %v88, 0.0
    %v92 = vadd.f32 %v87, %v91
    %93 = vadd.xlane.f32.xlu0 %v92
    %v94 = vpop.xlane.xlu0 %93
    %v95 = vsel %vm78, %v90, 0.0
    %v96 = vadd.f32 %v89, %v95
    %97 = vadd.xlane.f32.xlu0 %v96
    %v98 = vpop.xlane.xlu0 %97
    %v99 = vmax.f32 %v94, 1e-24
    %v100 = vmax.f32 %v98, 1e-24
    %v101 = vrsqrt.pop %v99
    %v102 = vrsqrt.pop %v100
    %v103 = vmul.f32 %v82, %v101
    %v104 = vmul.f32 %v86, %v102
    %vm105 = vcmask 7168
    %106 = vst.msk [vmem:[%s3] sm:$0xff] %vm105, %v103
    %107 = vst.msk [vmem:[%s3 + $0x8] sm:$0xff] %vm105, %v104
    %v108 = vsub.f32 1.0, %v103
    %v109 = vsub.f32 1.0, %v104
    %v110 = vmul.f32 %v108, 0.5
    %v111 = vmul.f32 %v109, 0.5
    %v112 = vmax.f32 %v110, 0.0
    %v113 = vmax.f32 %v111, 0.0
    %v114 = vmul.f32 %v112, %v112
    %v115 = vmul.f32 %v113, %v113
    %v116 = vmul.f32 %v114, %v114
    %v117 = vmul.f32 %v115, %v115
    %v118 = vsub.f32 0.5, %v110
    %v119 = vsub.f32 0.5, %v111
    %v120 = vmax.f32 %v118, 0.0
    %v121 = vmax.f32 %v119, 0.0
    %v122 = vmul.f32 %v120, %v120
    %v123 = vmul.f32 %v121, %v121
    %v124 = vmul.f32 %v122, %v122
    %v125 = vmul.f32 %v123, %v123
    %v126 = vsub.f32 %v110, 0.05
    %v127 = vsub.f32 %v111, 0.05
    %v128 = vmul.f32 %v126, 40.0
    %v129 = vmul.f32 %v127, 40.0
    %v130 = vmin.f32 %v128, 80.0
    %v131 = vmin.f32 %v129, 80.0
    %v132 = vmul.f32 %v130, 1.442695
    %v133 = vpow.pop %v132
    %v134 = vmul.f32 %v131, 1.442695
    %v135 = vpow.pop %v134
    %v136 = vmul.f32 %v116, %v133
    %v137 = vmul.f32 %v117, %v135
    %v138 = vsub.f32 0.4, %v110
    %v139 = vsub.f32 0.4, %v111
    %v140 = vmul.f32 %v138, 40.0
    %v141 = vmul.f32 %v139, 40.0
    %v142 = vmin.f32 %v140, 80.0
    %v143 = vmin.f32 %v141, 80.0
    %v144 = vmul.f32 %v142, 1.442695
    %v145 = vpow.pop %v144
    %v146 = vmul.f32 %v143, 1.442695
    %v147 = vpow.pop %v146
    %v148 = vmul.f32 %v124, %v145
    %v149 = vmul.f32 %v125, %v147
    %v150 = vld [vmem:[%s2] sm:$0xff]
    %v151 = vld [vmem:[%s2 + $0x8] sm:$0xff]
    %v152 = vlaneseq
    %v153 = vand.u32 %v152, 127
    %vm154 = vcmp.lt.s32.totalorder %v153, 0
    %v155 = vsub.s32 0, %v153
    %v156 = vsel %vm154, %v155, %v153
    %v157 = vshrl.u32 %v156, 1
    %v158 = vand.u32 %v156, 1
    %v159 = vsub.s32 0, %v158
    %v160 = vsel %vm154, %v159, %v158
    %vm161 = vcmp.ne.s32.totalorder %v160, 0
    %vm162 = vcmp.lt.s32.totalorder %v160, 0
    %vm163 = vmand %vm162, %vm161
    %v164 = vadd.s32 %v160, 2
    %v165 = vsel %vm163, %v164, %v160
    %vm166 = vcmp.eq.s32.totalorder %v165, 0
    %v167 = vsel %vm166, %v136, %v148
    %v168 = vsel %vm166, %v137, %v149
    %v169 = vmul.f32 %v150, %v167
    %v170 = vmul.f32 %v151, %v168
    %vm171 = vcmask 31744
    %v172 = vsel %vm171, %v169, 0.0
    %v173 = vsel %vm171, %v170, 0.0
    %v174 = vadd.f32 %v172, %v173
    %v175 = vrot.slane %v174, 4
    %v176 = vadd.f32 %v174, %v175
    %v177 = vrot.slane %v176, 2
    %v178 = vadd.f32 %v176, %v177
    %v179 = vrot.slane %v178, 1
    %v180 = vadd.f32 %v178, %v179
    %181 = vst.msk [vmem:[%s4] sm:$0xff] %vm171, %v180
    // Predicated region
    $region18: #{tpu_custom_call.1} parent=1 // pred_check
      _
    $region19: #{tpu_custom_call.1} parent=1 // pred_check_branch
      %183 = sbr.rel (0) target = $region21
    $region20: #{tpu_custom_call.1} parent=1 // pred_region
      _
    $region21: #{tpu_custom_call.1} parent=1 // pred_fallthru
      _
    // Predicated region
    $region22: #{tpu_custom_call.1} parent=1 // pred_check
      _
    $region23: #{tpu_custom_call.1} parent=1 // pred_check_branch
      %185 = sbr.rel (0) target = $region25
    $region24: #{tpu_custom_call.1} parent=1 // pred_region
      _
    $region25: #{tpu_custom_call.1} parent=1 // pred_fallthru
      _
    // Predicated region
    $region26: #{tpu_custom_call.1} parent=1 // pred_check
      _
    $region27: #{tpu_custom_call.1} parent=1 // pred_check_branch
      %187 = sbr.rel (0) target = $region29
    $region28: #{tpu_custom_call.1} parent=1 // pred_region
      _
    $region29: #{tpu_custom_call.1} parent=1 // pred_fallthru
      _
    // Predicated region
    $region30: #{tpu_custom_call.1} parent=1 // pred_check
      _
    $region31: #{tpu_custom_call.1} parent=1 // pred_check_branch
      %189 = sbr.rel (0) target = $region33
    $region32: #{tpu_custom_call.1} parent=1 // pred_region
      _
    $region33: #{tpu_custom_call.1} parent=1 // pred_fallthru
      _
    %190 = vsyncpa [#allocation3], 1

</llo_original>
